<compile_context>
chip_gen: v6e
topology: v6e:2x2x1
jax: 0.10.0
libtpu: 0.0.40
codegen_flags: <defaults>
</compile_context>

<pallas_src>
import functools

import jax
import jax.numpy as jnp
from jax.experimental import pallas as pl
from jax.experimental.pallas import tpu as pltpu

NO_CLASS = 60


def _devise_loss_kernel(labels_ref, vision_ref, lang_t_ref, out_ref, *, margin, batch_sz):
    vision = vision_ref[...]                     # (B, D) bf16
    lang_t = lang_t_ref[...]                     # (D, C) bf16
    labels = labels_ref[...]                     # (B, 1) int32

    # scores[b, c] = <vision[b], lang[c]> — canonical (M,K)@(K,N) MXU matmul,
    # bf16 operands, f32 accumulation.
    scores = jnp.dot(vision, lang_t, preferred_element_type=jnp.float32)  # (B, C) f32

    # Gather the true-class score per row via fused select + lane reduce
    # (no dynamic gather / no explicit one-hot materialization on TPU).
    col_ids = jax.lax.broadcasted_iota(jnp.int32, scores.shape, 1)        # (B, C)
    true_score = jnp.sum(jnp.where(col_ids == labels, scores, 0.0),
                         axis=1, keepdims=True)                           # (B, 1) f32

    # Hinge over every class (including the true one, matching the PyTorch loop).
    row_bias = jnp.float32(margin) - true_score                           # (B, 1)
    hinge = jnp.maximum(0.0, row_bias + scores)                           # (B, C)
    out_ref[0, 0] = jnp.sum(hinge) / jnp.float32(batch_sz)


def custom_devise_loss(vision_feature_projected, langauge_embeddings, class_label, margin):
    """JAX/Pallas equivalent of Custom_devise_loss.forward. Returns a scalar f32 loss."""
    vision = vision_feature_projected.astype(jnp.bfloat16)           # (B, D) bf16
    lang_t = langauge_embeddings.astype(jnp.bfloat16).T              # (D, C) bf16, hoisted to XLA
    B, D = vision.shape
    D2, C = lang_t.shape
    assert D == D2
    labels2d = class_label.reshape(B, 1).astype(jnp.int32)

    kernel = functools.partial(_devise_loss_kernel, margin=float(margin), batch_sz=B)
    out = pl.pallas_call(
        kernel,
        out_shape=jax.ShapeDtypeStruct((1, 1), jnp.float32),
        in_specs=[
            pl.BlockSpec(memory_space=pltpu.MemorySpace.VMEM),  # labels (B, 1) int32
            pl.BlockSpec(memory_space=pltpu.MemorySpace.VMEM),  # vision (B, D) bf16
            pl.BlockSpec(memory_space=pltpu.MemorySpace.VMEM),  # lang_T (D, C) bf16
        ],
        out_specs=pl.BlockSpec(memory_space=pltpu.MemorySpace.SMEM),  # scalar loss -> SMEM
    )(labels2d, vision, lang_t)
    return out[0, 0]


def _reference_loss(vision, lang, labels, margin):
    # Pure-JAX reference mirroring the PyTorch code (per-class loop collapsed), f32 math.
    vision = vision.astype(jnp.float32)
    lang = lang.astype(jnp.float32)
    true_emb = lang[labels]                                    # (B, D)
    true_score = jnp.sum(true_emb * vision, axis=1)            # (B,)
    scores = vision @ lang.T                                   # (B, C)
    hinge = jnp.maximum(0.0, margin - true_score[:, None] + scores)
    return jnp.sum(hinge) / vision.shape[0]


if __name__ == "__main__":
    margin = 0.1
    B, D, C = 8, 32, NO_CLASS

    key = jax.random.PRNGKey(0)
    k_vis, k_lang, k_lab = jax.random.split(key, 3)
    vision_feature_projected = jax.random.normal(k_vis, (B, D), dtype=jnp.float32)
    langauge_embeddings = jax.random.normal(k_lang, (C, D), dtype=jnp.float32)
    class_label = jax.random.randint(k_lab, (B,), 0, C, dtype=jnp.int32)

    loss = custom_devise_loss(vision_feature_projected, langauge_embeddings,
                              class_label, margin)
    loss = jax.block_until_ready(loss)

    # Numerics-matched reference: bf16-rounded operands (bf16xbf16 products are exact in f32),
    # f32 accumulation — should agree with the kernel up to accumulation order.
    vis_bf = vision_feature_projected.astype(jnp.bfloat16).astype(jnp.float32)
    lang_bf = langauge_embeddings.astype(jnp.bfloat16).astype(jnp.float32)
    ref_bf16 = _reference_loss(vis_bf, lang_bf, class_label, margin)
    assert jnp.allclose(loss, ref_bf16, rtol=1e-4, atol=1e-4), (loss, ref_bf16)

    # Semantic sanity check vs. full-f32 PyTorch-equivalent reference (looser: bf16 inputs).
    ref_f32 = _reference_loss(vision_feature_projected, langauge_embeddings,
                              class_label, margin)
    assert jnp.allclose(loss, ref_f32, rtol=5e-2, atol=5e-2), (loss, ref_f32)

    print("KERNEL_OK")
</pallas_src>

<mosaic_0001>
module attributes {stable_mosaic.version = 11 : i64} {
  func.func @_devise_loss_kernel(%arg0: memref<8x1xi32, #tpu.memory_space<vmem>>, %arg1: memref<8x32xbf16, #tpu.memory_space<vmem>>, %arg2: memref<32x60xbf16, #tpu.memory_space<vmem>>, %arg3: memref<1x1xf32, #tpu.memory_space<smem>>) attributes {dimension_semantics = [], scalar_prefetch = 0 : i64, scratch_operands = 0 : i64, tpu.core_type = #tpu.core_type<tc>} {
    %c0 = arith.constant 0 : index
    %c0_0 = arith.constant 0 : index
    %0 = vector.load %arg1[%c0, %c0_0] : memref<8x32xbf16, #tpu.memory_space<vmem>>, vector<8x32xbf16>
    %c0_1 = arith.constant 0 : index
    %c0_2 = arith.constant 0 : index
    %1 = vector.load %arg2[%c0_1, %c0_2] : memref<32x60xbf16, #tpu.memory_space<vmem>>, vector<32x60xbf16>
    %c0_3 = arith.constant 0 : index
    %c0_4 = arith.constant 0 : index
    %2 = vector.load %arg0[%c0_3, %c0_4] : memref<8x1xi32, #tpu.memory_space<vmem>>, vector<8x1xi32>
    %cst = arith.constant dense<0.000000e+00> : vector<8x60xf32>
    %3 = tpu.matmul %0, %1, %cst {dimension_numbers = #tpu.dot_dimension_numbers<[1], [0], [0], [1], [0, 0, 1, 1], [], []>} : vector<8x32xbf16>, vector<32x60xbf16>, vector<8x60xf32> -> vector<8x60xf32>
    %4 = tpu.iota {dimensions = array<i32: 1>} : vector<8x60xi32>
    %5 = vector.broadcast %2 : vector<8x1xi32> to vector<8x60xi32>
    %6 = arith.cmpi eq, %4, %5 : vector<8x60xi32>
    %cst_5 = arith.constant 0.000000e+00 : f32
    %7 = vector.broadcast %cst_5 : f32 to vector<8x60xf32>
    %8 = arith.select %6, %3, %7 : vector<8x60xi1>, vector<8x60xf32>
    %cst_6 = arith.constant dense<0.000000e+00> : vector<8xf32>
    %9 = vector.multi_reduction <add>, %8, %cst_6 [1] : vector<8x60xf32> to vector<8xf32>
    %10 = vector.shape_cast %9 : vector<8xf32> to vector<8x1xf32>
    %cst_7 = arith.constant 1.000000e-01 : f32
    %11 = vector.broadcast %cst_7 : f32 to vector<8x1xf32>
    %12 = arith.subf %11, %10 : vector<8x1xf32>
    %13 = vector.broadcast %12 : vector<8x1xf32> to vector<8x60xf32>
    %14 = arith.addf %13, %3 : vector<8x60xf32>
    %cst_8 = arith.constant 0.000000e+00 : f32
    %15 = vector.broadcast %cst_8 : f32 to vector<8x60xf32>
    %16 = arith.maximumf %15, %14 : vector<8x60xf32>
    %17 = vector.shape_cast %16 : vector<8x60xf32> to vector<1x8x60xf32>
    %cst_9 = arith.constant dense<0.000000e+00> : vector<1xf32>
    %18 = vector.multi_reduction <add>, %17, %cst_9 [1, 2] : vector<1x8x60xf32> to vector<1xf32>
    %19 = vector.shape_cast %18 : vector<1xf32> to vector<1x1x1xf32>
    %20 = vector.extract %19[0, 0, 0] : f32 from vector<1x1x1xf32>
    %cst_10 = arith.constant 8.000000e+00 : f32
    %21 = arith.divf %20, %cst_10 : f32
    %c0_11 = arith.constant 0 : index
    %c0_12 = arith.constant 0 : index
    %22 = memref.load %arg3[%c0_11, %c0_12] : memref<1x1xf32, #tpu.memory_space<smem>>
    memref.store %21, %arg3[%c0_11, %c0_12] : memref<1x1xf32, #tpu.memory_space<smem>>
    return
  }
}

</mosaic_0001>

<llo_original>
// kernel: tpu_custom_call.1
$region0: #{tpu_custom_call.1}
  #allocation0 [shape = 'u32[]', space=smem, size = 0x4, offset = 0x4, fixed_abs, tag = 'smem constant byte address 0x4 - core index']
  #allocation1 [shape = 'u32[144,128]{1,0:T(1,128)}', space=vmem, size = 0x12000, scoped, tag = 'internal scratch']
  %s0 = inlined_call_operand.vmem [shape: s32[8,1], index: 0, kind: input, shape index: {}]
  %s1 = inlined_call_operand.vmem [shape: bf16[8,32], index: 1, kind: input, shape index: {}]
  %s2 = inlined_call_operand.hbm [shape: bf16[32,60], index: 2, kind: input, shape index: {}]
  %s3 = inlined_call_operand.hbm [shape: f32[1,1], index: 3, kind: output, shape index: {}]
  %s4 = sld [smem:[#allocation0]]
  $region26: #{tpu_custom_call.1} parent=0
    _
  %s6 = ssub.s32 1, %s4
  %s7 = scalar_select 0, %s6, %s4
  $region1: #{tpu_custom_call.1} parent=0
    #allocation2 [shape = 'u8[8192]{0}', space=vmem, size = 0x2000, scoped, tag = 'input window, operand 2, single buffered']
    #allocation3 [shape = 's32[1]{0}', space=sflag, size = 0x4, scoped, tag = 'scoped memory for tpu_custom_call.1']
    #allocation4 [shape = 's32[1]{0}', space=sflag, size = 0x4, scoped, tag = 'scoped memory for tpu_custom_call.1']
    #allocation5 [shape = 'u8[512]{0}', space=smem, size = 0x200, scoped, tag = 'output window, operand 0, single buffered']
    %8 = vsyncpa [#allocation3], 0
    %9 = vsyncpa [#allocation4], 0
    // Predicated region
    $region2: #{tpu_custom_call.1} parent=1 // pred_check
      _
    $region3: #{tpu_custom_call.1} parent=1 // pred_check_branch
      %11 = sbr.rel (0) target = $region5
    $region4: #{tpu_custom_call.1} parent=1 // pred_region
      _
    $region5: #{tpu_custom_call.1} parent=1 // pred_fallthru
      _
    // Predicated region
    $region6: #{tpu_custom_call.1} parent=1 // pred_check
      _
    $region7: #{tpu_custom_call.1} parent=1 // pred_check_branch
      %13 = sbr.rel (0) target = $region9
    $region8: #{tpu_custom_call.1} parent=1 // pred_region
      _
    $region9: #{tpu_custom_call.1} parent=1 // pred_fallthru
      _
    // Predicated region
    $region10: #{tpu_custom_call.1} parent=1 // pred_check
      _
    $region11: #{tpu_custom_call.1} parent=1 // pred_check_branch
      %15 = sbr.rel (0) target = $region13
    $region12: #{tpu_custom_call.1} parent=1 // pred_region
      %s17 = ssub.s32 256, 256
      %18 = vsyncadd [#allocation3], %s17
      %s19 = sshll.u32 [#allocation2], 4
      %s20 = int_to_ptr.vmem [resolvable:$true] %s19
      %25 = dma.hbm_to_vmem [thread:$0]  %s2, 256, %s20, [#allocation3], 64, 64, 4
    $region13: #{tpu_custom_call.1} parent=1 // pred_fallthru
      _
    // Predicated region
    $region14: #{tpu_custom_call.1} parent=1 // pred_check
      _
    $region15: #{tpu_custom_call.1} parent=1 // pred_check_branch
      %27 = sbr.rel (0) target = $region17
    $region16: #{tpu_custom_call.1} parent=1 // pred_region
      %28 = dma.done [#allocation3], 256
    $region17: #{tpu_custom_call.1} parent=1 // pred_fallthru
      _
    %v30 = vld [vmem:[%s1] sm:$0xf]
    %v31 = vld [vmem:[#allocation2] sm:$0xf]
    %v32 = vld [vmem:[#allocation2 + $0x4] sm:$0xf]
    %v33 = vld [vmem:[#allocation2 + $0x8] sm:$0xf]
    %v34 = vld [vmem:[#allocation2 + $0xc] sm:$0xf]
    %v35 = vld [vmem:[%s0] sm:$0xff]
    %v40 = vunpack.c.l.b16 %v31
    %v41 = vunpack.c.l.b16 %v32
    %v42 = vunpack.c.l.b16 %v33
    %v43 = vunpack.c.l.b16 %v34
    %v44 = vpack.c.b16 %v41, %v40
    %v45 = vpack.c.b16 %v43, %v42
    %vm48 = vcmask 261120
    %v50 = vsel %vm48, %v30, 0
    %52 = vmatprep.subr.bf16.mxu0 0
    %53 = vmatpush1.bf16.msra.mxu0 0
    %54 = vmatprep.subr.bf16.mxu0 0
    %55 = vmatpush1.bf16.msra.mxu0 0
    %56 = vmatprep.subr.bf16.mxu0 0
    %57 = vmatpush1.bf16.msra.mxu0 0
    %58 = vmatprep.subr.bf16.mxu0 0
    %59 = vmatpush1.bf16.msra.mxu0 0
    %60 = vmatprep.subr.bf16.mxu0 0
    %61 = vmatpush1.bf16.msra.mxu0 0
    %62 = vmatprep.subr.bf16.mxu0 0
    %63 = vmatpush1.bf16.msra.mxu0 0
    %64 = vmatprep.subr.bf16.mxu0 0
    %65 = vmatpush1.bf16.msra.mxu0 %v45
    %66 = vmatprep.subr.bf16.mxu0 0
    %67 = vmatpush1.bf16.msra.mxu0 %v44
    %68 = vmatprep.subr.bf16.mxu0 0
    %69 = vmatpush2.bf16.msra.mxu0 0
    %70 = vmatprep.subr.bf16.mxu0 0
    %71 = vmatpush2.bf16.msra.mxu0 0
    %72 = vmatprep.subr.bf16.mxu0 0
    %73 = vmatpush2.bf16.msra.mxu0 0
    %74 = vmatprep.subr.bf16.mxu0 0
    %75 = vmatpush2.bf16.msra.mxu0 0
    %76 = vmatprep.subr.bf16.mxu0 0
    %77 = vmatpush2.bf16.msra.mxu0 0
    %78 = vmatprep.subr.bf16.mxu0 0
    %79 = vmatpush2.bf16.msra.mxu0 0
    %80 = vmatprep.subr.bf16.mxu0 0
    %81 = vmatpush2.bf16.msra.mxu0 0
    %82 = vmatprep.subr.bf16.mxu0 0
    %83 = vmatpush2.bf16.msra.mxu0 0
    %84 = vmatprep.mubr.bf16.mxu0 0
    %85 = vmatmul.mubr.bf16.gmra.mxu0 %v50
    %v86 = vpop.f32.mrf.mxu0
    %v87 = vadd.f32 0.0, %v86
    %v88 = vpop.f32.mrf.mxu0
    %v89 = vpop.f32.mrf.mxu0
    %v90 = vpop.f32.mrf.mxu0
    %91 = vdwg.mxu0
    %v92 = vlaneseq
    %v93 = vand.u32 %v92, 127
    %94 = vset.pattern.permute.xlu0 0
    %95 = vperm.xlu0 %94, %v35
    %v96 = vpop.permute.xlu0 %95
    %vm97 = vcmp.eq.s32.totalorder %v93, %v96
    %v98 = vsel %vm97, %v87, 0.0
    %vm99 = vcmask 490496
    %v100 = vsel %vm99, %v98, 0.0
    %101 = vadd.xlane.f32.xlu0 %v100
    %v102 = vpop.xlane.xlu0 %101
    %v103 = vsub.f32 0.1, %v102
    %v104 = vadd.f32 %v103, %v87
    %v105 = vmax.f32 %v104, 0.0
    %v106 = vsel %vm99, %v105, 0.0
    %107 = vadd.xlane.f32.xlu0 %v106
    %v108 = vpop.xlane.xlu0 %107
    %v109 = vrot.slane %v108, 4
    %v110 = vadd.f32 %v108, %v109
    %v111 = vrot.slane %v110, 2
    %v112 = vadd.f32 %v110, %v111
    %v113 = vrot.slane %v112, 1
    %v114 = vadd.f32 %v112, %v113
    %s115 = vtos %v114
    %v116 = vrcp.pop 8.0
    %s117 = vtos %v116
    %s118 = smul.f32 %s115, %s117
    %s119 = scalar_lea.smem [#allocation5], 0
    %120 = sst [smem:[%s119]] %s118
    // Predicated region
    $region18: #{tpu_custom_call.1} parent=1 // pred_check
      _
    $region19: #{tpu_custom_call.1} parent=1 // pred_check_branch
      %122 = sbr.rel (0) target = $region21
    $region20: #{tpu_custom_call.1} parent=1 // pred_region
      %s124 = ssub.s32 16, 16
      %125 = vsyncadd [#allocation4], %s124
      %128 = dma.smem_to_hbm [#allocation5], 16, %s3, [#allocation4]
    $region21: #{tpu_custom_call.1} parent=1 // pred_fallthru
      _
    // Predicated region
    $region22: #{tpu_custom_call.1} parent=1 // pred_check
      _
    $region23: #{tpu_custom_call.1} parent=1 // pred_check_branch
      %130 = sbr.rel (0) target = $region25
    $region24: #{tpu_custom_call.1} parent=1 // pred_region
      %131 = dma.done [#allocation4], 16
    $region25: #{tpu_custom_call.1} parent=1 // pred_fallthru
      _
    %132 = sfence
    %133 = vsyncpa [#allocation3], 1
    %134 = vsyncpa [#allocation4], 1

</llo_original>
